<compile_context>
chip_gen: v5e
topology: v5e:2x2
jax: 0.10.0
libtpu: 0.0.40
codegen_flags: <defaults>
</compile_context>

<pallas_src>
import numpy as np
import jax
import jax.numpy as jnp
from jax import lax
from jax.experimental import pallas as pl
from jax.experimental.pallas import tpu as pltpu

# ---------------- model hyper-params (small, forward-consistent) ------------
VOCAB = 100
VOCAB_PAD = 128          # one-hot width / fused-table rows, full lane tile
EMB = 32                 # embedding_size
HID = 32                 # hidden_size
NUM_CLASSES = 5
CONV_PAD = 128           # merged conv output width (3*HID=96 padded to 128)
OUT_PAD = 128            # lane-dense FC output, sliced back to NUM_CLASSES
KERNEL_SIZES = (3, 4, 5)
KMAX = max(KERNEL_SIZES)
B, L = 2, 16             # batch, sequence length
B_PAD = 8                # sublane-padded FC/output rows
LO = tuple(L - k + 1 for k in KERNEL_SIZES)   # valid conv lengths (14, 13, 12)


# ------------------------------- Pallas kernel ------------------------------
def cnn_kernel(ids_ref, tabw_ref, bm_ref, vlen_ref, fcw_ref, fcb_ref, out_ref):
    # ---- 1) fused embedding+conv: sum over taps of one-hot @ (tab @ W_j) ---
    # ids_ref[j] holds ids shifted by tap j (host-side shift of the tiny ids
    # array); invalid / cross-sequence positions are masked out in step 3.
    vocab_iota = lax.broadcasted_iota(jnp.int32, (B * L, VOCAB_PAD), 1)
    y = jnp.zeros((B * L, CONV_PAD), jnp.float32)
    for j in range(KMAX):                                     # static unroll
        oh = (ids_ref[j] == vocab_iota).astype(jnp.bfloat16)  # (B*L, 128)
        y = y + jnp.dot(oh, tabw_ref[j],
                        preferred_element_type=jnp.float32)   # (B*L, 128) f32

    # ---- 2) bias + ReLU (f32 elementwise; no bf16 VPU on v5e) --------------
    y = jnp.maximum(y + bm_ref[...], 0.0)                     # (B*L, 128)

    # ---- 3) mask invalid window positions per branch, global max pool ------
    # post-ReLU values are >= 0, so zeroing invalid slots cannot win the max
    t_idx = lax.broadcasted_iota(jnp.int32, (L, CONV_PAD), 0)
    mask = t_idx < vlen_ref[...]                              # (L, 128)
    y = jnp.where(mask[None], y.reshape(B, L, CONV_PAD), 0.0)
    feat = jnp.max(y, axis=1)                                 # (B, 128)

    # ---- 4) dropout == identity (inference); FC with sublane-padded M ------
    # TODO(synk): nn.Dropout(0.5) training-mode stochastic masking is not
    # reproduced (inference semantics only).
    feat8 = jnp.concatenate(
        [feat, jnp.zeros((B_PAD - B, CONV_PAD), jnp.float32)], axis=0)
    out = jnp.dot(feat8.astype(jnp.bfloat16), fcw_ref[...],
                  preferred_element_type=jnp.float32) + fcb_ref[...]
    out_ref[...] = out                                        # (8, 128)


def _full_spec(shape):
    nd = len(shape)
    return pl.BlockSpec(shape, lambda i, _nd=nd: (0,) * _nd)


# ------------------------------- wrapper -------------------------------------
def cnn_forward(token_ids, packed):
    bsz, seq = token_ids.shape
    # host-side tap shift of the tiny ids array (replaces in-kernel im2col):
    # ids_sh[j, b*L + t] = ids[b, t + j]  (0-padded past the sequence end;
    # those positions are zeroed by the validity mask before the max pool)
    shifted = []
    for j in range(KMAX):
        s = jnp.pad(token_ids[:, j:], ((0, 0), (0, j)))
        shifted.append(s.reshape(bsz * seq, 1))
    ids_sh = jnp.stack(shifted, axis=0).astype(jnp.int32)     # (KMAX, B*L, 1)

    args = (ids_sh, packed['tabw'], packed['bm'], packed['vlen'],
            packed['fcw'], packed['fcb'])
    out_pad = pl.pallas_call(
        cnn_kernel,
        out_shape=jax.ShapeDtypeStruct((B_PAD, OUT_PAD), jnp.float32),
        grid=(1,),
        in_specs=[_full_spec(a.shape) for a in args],
        out_specs=_full_spec((B_PAD, OUT_PAD)),
        # Everything fits in one grid step at these shapes.  When scaling
        # batch: add a leading batch-tile grid axis marked "parallel"
        # (shards across v7x's 2 TensorCores); keep the weight specs with
        # constant index_maps so they stay VMEM-resident; size the batch tile
        # from physical VMEM (64 MiB on v7x, 128 MiB on v5e/v6e -- roughly 2x
        # larger tiles there) and set vmem_limit_bytes explicitly.
        compiler_params=pltpu.CompilerParams(
            dimension_semantics=("arbitrary",)),
    )(*args)
    return out_pad[:bsz, :NUM_CLASSES]


# ------------------------------- params --------------------------------------
def init_params(key):
    ks = jax.random.split(key, 9)
    p = {'embedding': jax.random.normal(ks[0], (VOCAB, EMB), jnp.float32)}
    for i, k in enumerate(KERNEL_SIZES):
        # PyTorch Conv1d weight is (H, E, k); stored here as (k, E, H)
        # (permute(2, 1, 0) when loading real torch weights).
        p[f'w{k}'] = 0.05 * jax.random.normal(ks[1 + 2 * i], (k, EMB, HID),
                                              jnp.float32)
        p[f'b{k}'] = 0.05 * jax.random.normal(ks[2 + 2 * i], (1, HID),
                                              jnp.float32)
    # PyTorch Linear weight is (5, 3H); stored here as the transpose (3H, 5)
    p['fc_w'] = 0.05 * jax.random.normal(ks[7], (3 * HID, NUM_CLASSES),
                                         jnp.float32)
    p['fc_b'] = 0.05 * jax.random.normal(ks[8], (1, NUM_CLASSES), jnp.float32)
    return p


def pack_params(p):
    """One-time weight folding / padding / bf16 cast for the kernel.

    Folds embedding @ conv-tap weight into per-tap lookup tables in f32, then
    casts once to bf16 (one rounding instead of two on the old path).
    """
    tab_pad = jnp.zeros((VOCAB_PAD, EMB), jnp.float32).at[:VOCAB].set(
        p['embedding'])
    tabw = []
    for j in range(KMAX):
        wj = jnp.zeros((EMB, CONV_PAD), jnp.float32)
        for i, k in enumerate(KERNEL_SIZES):
            if j < k:
                wj = wj.at[:, i * HID:(i + 1) * HID].set(p[f'w{k}'][j])
        tabw.append(tab_pad @ wj)                       # (VOCAB_PAD, 128) f32
    tabw = jnp.stack(tabw, axis=0).astype(jnp.bfloat16)  # (KMAX, 128, 128)

    bm = jnp.zeros((1, CONV_PAD), jnp.float32)
    bm = bm.at[:, :3 * HID].set(
        jnp.concatenate([p[f'b{k}'] for k in KERNEL_SIZES], axis=-1))

    vlen = jnp.zeros((1, CONV_PAD), jnp.int32)          # per-channel valid len
    for i, k in enumerate(KERNEL_SIZES):
        vlen = vlen.at[:, i * HID:(i + 1) * HID].set(L - k + 1)

    fcw = jnp.zeros((CONV_PAD, OUT_PAD), jnp.float32)
    fcw = fcw.at[:3 * HID, :NUM_CLASSES].set(p['fc_w']).astype(jnp.bfloat16)
    fcb = jnp.zeros((1, OUT_PAD), jnp.float32).at[:, :NUM_CLASSES].set(
        p['fc_b'])
    return dict(tabw=tabw, bm=bm, vlen=vlen, fcw=fcw, fcb=fcb)


# ------------------------------- reference -----------------------------------
def cnn_reference(token_ids, params):
    emb = jnp.take(params['embedding'], token_ids, axis=0)        # (B, L, E)
    pools = []
    for k in KERNEL_SIZES:
        lo = L - k + 1
        acc = jnp.zeros((token_ids.shape[0], lo, HID), jnp.float32)
        for j in range(k):
            acc = acc + jnp.einsum('ble,eh->blh', emb[:, j:j + lo, :],
                                   params[f'w{k}'][j])
        acc = jnp.maximum(acc + params[f'b{k}'][None], 0.0)
        pools.append(jnp.max(acc, axis=1))
    feat = jnp.concatenate(pools, axis=-1)
    return feat @ params['fc_w'] + params['fc_b']


if __name__ == "__main__":
    key = jax.random.PRNGKey(0)
    k_tok, k_par = jax.random.split(key)
    token_ids = jax.random.randint(k_tok, (B, L), 0, VOCAB, dtype=jnp.int32)
    params = init_params(k_par)
    packed = pack_params(params)

    out = cnn_forward(token_ids, packed)
    out = jax.block_until_ready(out)

    ref = cnn_reference(token_ids, params)
    assert out.shape == (B, NUM_CLASSES)
    # bf16 fused tables / bf16 FC weights -> compare with bf16-level tolerance
    assert jnp.allclose(out, ref, atol=5e-2, rtol=5e-2), (
        float(jnp.max(jnp.abs(out - ref))))
    print("KERNEL_OK")
</pallas_src>

<mosaic_0001>
module attributes {stable_mosaic.version = 11 : i64} {
  func.func @cnn_kernel(%arg0: i32, %arg1: memref<5x32x1xi32, #tpu.memory_space<vmem>>, %arg2: memref<5x128x128xbf16, #tpu.memory_space<vmem>>, %arg3: memref<1x128xf32, #tpu.memory_space<vmem>>, %arg4: memref<1x128xi32, #tpu.memory_space<vmem>>, %arg5: memref<128x128xbf16, #tpu.memory_space<vmem>>, %arg6: memref<1x128xf32, #tpu.memory_space<vmem>>, %arg7: memref<8x128xf32, #tpu.memory_space<vmem>>) attributes {dimension_semantics = [#tpu.dimension_semantics<arbitrary>], iteration_bounds = array<i64: 1>, scalar_prefetch = 0 : i64, scratch_operands = 0 : i64, tpu.core_type = #tpu.core_type<tc>, window_params = [{pipeline_mode = #tpu.pipeline_mode<synchronous>, transform_indices = @transform_0, window_bounds = array<i64: 5, 32, 1>}, {pipeline_mode = #tpu.pipeline_mode<synchronous>, transform_indices = @transform_1, window_bounds = array<i64: 5, 128, 128>}, {pipeline_mode = #tpu.pipeline_mode<synchronous>, transform_indices = @transform_2, window_bounds = array<i64: 1, 128>}, {pipeline_mode = #tpu.pipeline_mode<synchronous>, transform_indices = @transform_3, window_bounds = array<i64: 1, 128>}, {pipeline_mode = #tpu.pipeline_mode<synchronous>, transform_indices = @transform_4, window_bounds = array<i64: 128, 128>}, {pipeline_mode = #tpu.pipeline_mode<synchronous>, transform_indices = @transform_5, window_bounds = array<i64: 1, 128>}, {pipeline_mode = #tpu.pipeline_mode<synchronous>, transform_indices = @transform_6, window_bounds = array<i64: 8, 128>}]} {
    %0 = tpu.iota {dimensions = array<i32: 1>} : vector<32x128xi32>
    %cst = arith.constant 0.000000e+00 : f32
    %1 = vector.broadcast %cst : f32 to vector<32x128xf32>
    %c0 = arith.constant 0 : index
    %c0_0 = arith.constant 0 : index
    %c0_1 = arith.constant 0 : index
    %2 = vector.load %arg1[%c0, %c0_0, %c0_1] : memref<5x32x1xi32, #tpu.memory_space<vmem>>, vector<1x32x1xi32>
    %3 = vector.shape_cast %2 : vector<1x32x1xi32> to vector<32x1xi32>
    %4 = vector.broadcast %3 : vector<32x1xi32> to vector<32x128xi32>
    %5 = arith.cmpi eq, %4, %0 : vector<32x128xi32>
    %6 = arith.extui %5 : vector<32x128xi1> to vector<32x128xi32>
    %7 = arith.sitofp %6 : vector<32x128xi32> to vector<32x128xf32>
    %8 = arith.truncf %7 : vector<32x128xf32> to vector<32x128xbf16>
    %c0_2 = arith.constant 0 : index
    %c0_3 = arith.constant 0 : index
    %c0_4 = arith.constant 0 : index
    %9 = vector.load %arg2[%c0_2, %c0_3, %c0_4] : memref<5x128x128xbf16, #tpu.memory_space<vmem>>, vector<1x128x128xbf16>
    %10 = vector.shape_cast %9 : vector<1x128x128xbf16> to vector<128x128xbf16>
    %cst_5 = arith.constant dense<0.000000e+00> : vector<32x128xf32>
    %11 = tpu.matmul %8, %10, %cst_5 {dimension_numbers = #tpu.dot_dimension_numbers<[1], [0], [0], [1], [0, 0, 1, 1], [], []>} : vector<32x128xbf16>, vector<128x128xbf16>, vector<32x128xf32> -> vector<32x128xf32>
    %12 = arith.addf %1, %11 : vector<32x128xf32>
    %c1 = arith.constant 1 : index
    %c0_6 = arith.constant 0 : index
    %c0_7 = arith.constant 0 : index
    %13 = vector.load %arg1[%c1, %c0_6, %c0_7] : memref<5x32x1xi32, #tpu.memory_space<vmem>>, vector<1x32x1xi32>
    %14 = vector.shape_cast %13 : vector<1x32x1xi32> to vector<32x1xi32>
    %15 = vector.broadcast %14 : vector<32x1xi32> to vector<32x128xi32>
    %16 = arith.cmpi eq, %15, %0 : vector<32x128xi32>
    %17 = arith.extui %16 : vector<32x128xi1> to vector<32x128xi32>
    %18 = arith.sitofp %17 : vector<32x128xi32> to vector<32x128xf32>
    %19 = arith.truncf %18 : vector<32x128xf32> to vector<32x128xbf16>
    %c1_8 = arith.constant 1 : index
    %c0_9 = arith.constant 0 : index
    %c0_10 = arith.constant 0 : index
    %20 = vector.load %arg2[%c1_8, %c0_9, %c0_10] : memref<5x128x128xbf16, #tpu.memory_space<vmem>>, vector<1x128x128xbf16>
    %21 = vector.shape_cast %20 : vector<1x128x128xbf16> to vector<128x128xbf16>
    %cst_11 = arith.constant dense<0.000000e+00> : vector<32x128xf32>
    %22 = tpu.matmul %19, %21, %cst_11 {dimension_numbers = #tpu.dot_dimension_numbers<[1], [0], [0], [1], [0, 0, 1, 1], [], []>} : vector<32x128xbf16>, vector<128x128xbf16>, vector<32x128xf32> -> vector<32x128xf32>
    %23 = arith.addf %12, %22 : vector<32x128xf32>
    %c2 = arith.constant 2 : index
    %c0_12 = arith.constant 0 : index
    %c0_13 = arith.constant 0 : index
    %24 = vector.load %arg1[%c2, %c0_12, %c0_13] : memref<5x32x1xi32, #tpu.memory_space<vmem>>, vector<1x32x1xi32>
    %25 = vector.shape_cast %24 : vector<1x32x1xi32> to vector<32x1xi32>
    %26 = vector.broadcast %25 : vector<32x1xi32> to vector<32x128xi32>
    %27 = arith.cmpi eq, %26, %0 : vector<32x128xi32>
    %28 = arith.extui %27 : vector<32x128xi1> to vector<32x128xi32>
    %29 = arith.sitofp %28 : vector<32x128xi32> to vector<32x128xf32>
    %30 = arith.truncf %29 : vector<32x128xf32> to vector<32x128xbf16>
    %c2_14 = arith.constant 2 : index
    %c0_15 = arith.constant 0 : index
    %c0_16 = arith.constant 0 : index
    %31 = vector.load %arg2[%c2_14, %c0_15, %c0_16] : memref<5x128x128xbf16, #tpu.memory_space<vmem>>, vector<1x128x128xbf16>
    %32 = vector.shape_cast %31 : vector<1x128x128xbf16> to vector<128x128xbf16>
    %cst_17 = arith.constant dense<0.000000e+00> : vector<32x128xf32>
    %33 = tpu.matmul %30, %32, %cst_17 {dimension_numbers = #tpu.dot_dimension_numbers<[1], [0], [0], [1], [0, 0, 1, 1], [], []>} : vector<32x128xbf16>, vector<128x128xbf16>, vector<32x128xf32> -> vector<32x128xf32>
    %34 = arith.addf %23, %33 : vector<32x128xf32>
    %c3 = arith.constant 3 : index
    %c0_18 = arith.constant 0 : index
    %c0_19 = arith.constant 0 : index
    %35 = vector.load %arg1[%c3, %c0_18, %c0_19] : memref<5x32x1xi32, #tpu.memory_space<vmem>>, vector<1x32x1xi32>
    %36 = vector.shape_cast %35 : vector<1x32x1xi32> to vector<32x1xi32>
    %37 = vector.broadcast %36 : vector<32x1xi32> to vector<32x128xi32>
    %38 = arith.cmpi eq, %37, %0 : vector<32x128xi32>
    %39 = arith.extui %38 : vector<32x128xi1> to vector<32x128xi32>
    %40 = arith.sitofp %39 : vector<32x128xi32> to vector<32x128xf32>
    %41 = arith.truncf %40 : vector<32x128xf32> to vector<32x128xbf16>
    %c3_20 = arith.constant 3 : index
    %c0_21 = arith.constant 0 : index
    %c0_22 = arith.constant 0 : index
    %42 = vector.load %arg2[%c3_20, %c0_21, %c0_22] : memref<5x128x128xbf16, #tpu.memory_space<vmem>>, vector<1x128x128xbf16>
    %43 = vector.shape_cast %42 : vector<1x128x128xbf16> to vector<128x128xbf16>
    %cst_23 = arith.constant dense<0.000000e+00> : vector<32x128xf32>
    %44 = tpu.matmul %41, %43, %cst_23 {dimension_numbers = #tpu.dot_dimension_numbers<[1], [0], [0], [1], [0, 0, 1, 1], [], []>} : vector<32x128xbf16>, vector<128x128xbf16>, vector<32x128xf32> -> vector<32x128xf32>
    %45 = arith.addf %34, %44 : vector<32x128xf32>
    %c4 = arith.constant 4 : index
    %c0_24 = arith.constant 0 : index
    %c0_25 = arith.constant 0 : index
    %46 = vector.load %arg1[%c4, %c0_24, %c0_25] : memref<5x32x1xi32, #tpu.memory_space<vmem>>, vector<1x32x1xi32>
    %47 = vector.shape_cast %46 : vector<1x32x1xi32> to vector<32x1xi32>
    %48 = vector.broadcast %47 : vector<32x1xi32> to vector<32x128xi32>
    %49 = arith.cmpi eq, %48, %0 : vector<32x128xi32>
    %50 = arith.extui %49 : vector<32x128xi1> to vector<32x128xi32>
    %51 = arith.sitofp %50 : vector<32x128xi32> to vector<32x128xf32>
    %52 = arith.truncf %51 : vector<32x128xf32> to vector<32x128xbf16>
    %c4_26 = arith.constant 4 : index
    %c0_27 = arith.constant 0 : index
    %c0_28 = arith.constant 0 : index
    %53 = vector.load %arg2[%c4_26, %c0_27, %c0_28] : memref<5x128x128xbf16, #tpu.memory_space<vmem>>, vector<1x128x128xbf16>
    %54 = vector.shape_cast %53 : vector<1x128x128xbf16> to vector<128x128xbf16>
    %cst_29 = arith.constant dense<0.000000e+00> : vector<32x128xf32>
    %55 = tpu.matmul %52, %54, %cst_29 {dimension_numbers = #tpu.dot_dimension_numbers<[1], [0], [0], [1], [0, 0, 1, 1], [], []>} : vector<32x128xbf16>, vector<128x128xbf16>, vector<32x128xf32> -> vector<32x128xf32>
    %56 = arith.addf %45, %55 : vector<32x128xf32>
    %c0_30 = arith.constant 0 : index
    %c0_31 = arith.constant 0 : index
    %57 = vector.load %arg3[%c0_30, %c0_31] : memref<1x128xf32, #tpu.memory_space<vmem>>, vector<1x128xf32>
    %58 = vector.broadcast %57 : vector<1x128xf32> to vector<32x128xf32>
    %59 = arith.addf %56, %58 : vector<32x128xf32>
    %cst_32 = arith.constant 0.000000e+00 : f32
    %60 = vector.broadcast %cst_32 : f32 to vector<32x128xf32>
    %61 = arith.maximumf %59, %60 : vector<32x128xf32>
    %62 = tpu.iota {dimensions = array<i32: 0>} : vector<16x128xi32>
    %c0_33 = arith.constant 0 : index
    %c0_34 = arith.constant 0 : index
    %63 = vector.load %arg4[%c0_33, %c0_34] : memref<1x128xi32, #tpu.memory_space<vmem>>, vector<1x128xi32>
    %64 = vector.broadcast %63 : vector<1x128xi32> to vector<16x128xi32>
    %65 = arith.cmpi slt, %62, %64 : vector<16x128xi32>
    %66 = vector.shape_cast %65 : vector<16x128xi1> to vector<1x16x128xi1>
    %67 = vector.shape_cast %61 : vector<32x128xf32> to vector<2x16x128xf32>
    %cst_35 = arith.constant 0.000000e+00 : f32
    %68 = vector.shape_cast %66 : vector<1x16x128xi1> to vector<1x16x128xi1>
    %69 = vector.broadcast %68 : vector<1x16x128xi1> to vector<2x16x128xi1>
    %70 = vector.broadcast %cst_35 : f32 to vector<2x16x128xf32>
    %71 = arith.select %69, %67, %70 : vector<2x16x128xi1>, vector<2x16x128xf32>
    %cst_36 = arith.constant dense<0xFF800000> : vector<2x128xf32>
    %72 = vector.multi_reduction <maximumf>, %71, %cst_36 [1] : vector<2x16x128xf32> to vector<2x128xf32>
    %cst_37 = arith.constant 0.000000e+00 : f32
    %73 = vector.broadcast %cst_37 : f32 to vector<6x128xf32>
    %74 = tpu.concatenate %72, %73 in 0 : vector<2x128xf32>, vector<6x128xf32> -> vector<8x128xf32>
    %75 = arith.truncf %74 : vector<8x128xf32> to vector<8x128xbf16>
    %c0_38 = arith.constant 0 : index
    %c0_39 = arith.constant 0 : index
    %76 = vector.load %arg5[%c0_38, %c0_39] : memref<128x128xbf16, #tpu.memory_space<vmem>>, vector<128x128xbf16>
    %cst_40 = arith.constant dense<0.000000e+00> : vector<8x128xf32>
    %77 = tpu.matmul %75, %76, %cst_40 {dimension_numbers = #tpu.dot_dimension_numbers<[1], [0], [0], [1], [0, 0, 1, 1], [], []>} : vector<8x128xbf16>, vector<128x128xbf16>, vector<8x128xf32> -> vector<8x128xf32>
    %c0_41 = arith.constant 0 : index
    %c0_42 = arith.constant 0 : index
    %78 = vector.load %arg6[%c0_41, %c0_42] : memref<1x128xf32, #tpu.memory_space<vmem>>, vector<1x128xf32>
    %79 = vector.broadcast %78 : vector<1x128xf32> to vector<8x128xf32>
    %80 = arith.addf %77, %79 : vector<8x128xf32>
    %c0_43 = arith.constant 0 : index
    %c0_44 = arith.constant 0 : index
    %81 = vector.load %arg7[%c0_43, %c0_44] : memref<8x128xf32, #tpu.memory_space<vmem>>, vector<8x128xf32>
    tpu.vector_store %arg7[%c0_43, %c0_44], %80 {strides = array<i32>} : memref<8x128xf32, #tpu.memory_space<vmem>>, vector<8x128xf32>,
    return
  }
  func.func @transform_0(%arg0: i32) -> (i32, i32, i32) {
    %c0_i32 = arith.constant 0 : i32
    %c0_i32_0 = arith.constant 0 : i32
    %c0_i32_1 = arith.constant 0 : i32
    %c0_i32_2 = arith.constant 0 : i32
    return %c0_i32, %c0_i32_0, %c0_i32_1 : i32, i32, i32
  }
  func.func @transform_1(%arg0: i32) -> (i32, i32, i32) {
    %c0_i32 = arith.constant 0 : i32
    %c0_i32_0 = arith.constant 0 : i32
    %c0_i32_1 = arith.constant 0 : i32
    %c0_i32_2 = arith.constant 0 : i32
    return %c0_i32, %c0_i32_0, %c0_i32_1 : i32, i32, i32
  }
  func.func @transform_2(%arg0: i32) -> (i32, i32) {
    %c0_i32 = arith.constant 0 : i32
    %c0_i32_0 = arith.constant 0 : i32
    %c0_i32_1 = arith.constant 0 : i32
    return %c0_i32, %c0_i32_0 : i32, i32
  }
  func.func @transform_3(%arg0: i32) -> (i32, i32) {
    %c0_i32 = arith.constant 0 : i32
    %c0_i32_0 = arith.constant 0 : i32
    %c0_i32_1 = arith.constant 0 : i32
    return %c0_i32, %c0_i32_0 : i32, i32
  }
  func.func @transform_4(%arg0: i32) -> (i32, i32) {
    %c0_i32 = arith.constant 0 : i32
    %c0_i32_0 = arith.constant 0 : i32
    %c0_i32_1 = arith.constant 0 : i32
    return %c0_i32, %c0_i32_0 : i32, i32
  }
  func.func @transform_5(%arg0: i32) -> (i32, i32) {
    %c0_i32 = arith.constant 0 : i32
    %c0_i32_0 = arith.constant 0 : i32
    %c0_i32_1 = arith.constant 0 : i32
    return %c0_i32, %c0_i32_0 : i32, i32
  }
  func.func @transform_6(%arg0: i32) -> (i32, i32) {
    %c0_i32 = arith.constant 0 : i32
    %c0_i32_0 = arith.constant 0 : i32
    %c0_i32_1 = arith.constant 0 : i32
    return %c0_i32, %c0_i32_0 : i32, i32
  }
}

</mosaic_0001>

<llo_original>
// kernel: tpu_custom_call.1
$region0: #{tpu_custom_call.1}
  #allocation0 [shape = 'u32[]', space=smem, size = 0x4, offset = 0x4, fixed_abs, tag = 'smem constant byte address 0x4 - core index']
  #allocation1 [shape = 'u32[72,128]{1,0:T(1,128)}', space=vmem, size = 0x9000, scoped, tag = 'internal scratch']
  %s0 = inlined_call_operand.vmem [shape: s32[5,32,1], index: 0, kind: input, shape index: {}]
  %s1 = inlined_call_operand.hbm [shape: bf16[5,128,128], index: 1, kind: input, shape index: {}]
  %s2 = inlined_call_operand.vmem [shape: f32[1,128], index: 2, kind: input, shape index: {}]
  %s3 = inlined_call_operand.vmem [shape: s32[1,128], index: 3, kind: input, shape index: {}]
  %s4 = inlined_call_operand.vmem [shape: bf16[128,128], index: 4, kind: input, shape index: {}]
  %s5 = inlined_call_operand.vmem [shape: f32[1,128], index: 5, kind: input, shape index: {}]
  %s6 = inlined_call_operand.hbm [shape: f32[8,128], index: 6, kind: output, shape index: {}]
  %s7 = sld [smem:[#allocation0]]
  $region38: #{tpu_custom_call.1} parent=0
    _
  %s9 = ssub.s32 1, %s7
  %s10 = scalar_select 0, %s9, %s7
  $region1: #{tpu_custom_call.1} parent=0
    #allocation2 [shape = 'u8[163840]{0}', space=vmem, size = 0x28000, scoped, tag = 'input window, operand 1, single buffered']
    #allocation3 [shape = 's32[1]{0}', space=sflag, size = 0x4, scoped, tag = 'scoped memory for tpu_custom_call.1']
    #allocation4 [shape = 's32[1]{0}', space=sflag, size = 0x4, scoped, tag = 'scoped memory for tpu_custom_call.1']
    #allocation5 [shape = 'u8[4096]{0}', space=vmem, size = 0x1000, scoped, tag = 'output window, operand 0, single buffered']
    %11 = vsyncpa [#allocation3], 0
    %12 = vsyncpa [#allocation4], 0
    // Predicated region
    $region2: #{tpu_custom_call.1} parent=1 // pred_check
      _
    $region3: #{tpu_custom_call.1} parent=1 // pred_check_branch
      %14 = sbr.rel (0) target = $region5
    $region4: #{tpu_custom_call.1} parent=1 // pred_region
      _
    $region5: #{tpu_custom_call.1} parent=1 // pred_fallthru
      _
    // Predicated region
    $region6: #{tpu_custom_call.1} parent=1 // pred_check
      _
    $region7: #{tpu_custom_call.1} parent=1 // pred_check_branch
      %16 = sbr.rel (0) target = $region9
    $region8: #{tpu_custom_call.1} parent=1 // pred_region
      %18 = vsyncadd [#allocation3], 0
      %s19 = sshll.u32 %s1, 4
      %s20 = int_to_ptr.hbm [resolvable:$true] %s19
      %s21 = sshll.u32 [#allocation2], 4
      %s22 = int_to_ptr.vmem [resolvable:$true] %s21
      %27 = dma.hbm_to_vmem [thread:$0]  %s20, 5120, %s22, [#allocation3], 64, 64, 4
    $region9: #{tpu_custom_call.1} parent=1 // pred_fallthru
      _
    // Predicated region
    $region10: #{tpu_custom_call.1} parent=1 // pred_check
      _
    $region11: #{tpu_custom_call.1} parent=1 // pred_check_branch
      %29 = sbr.rel (0) target = $region13
    $region12: #{tpu_custom_call.1} parent=1 // pred_region
      _
    $region13: #{tpu_custom_call.1} parent=1 // pred_fallthru
      _
    // Predicated region
    $region14: #{tpu_custom_call.1} parent=1 // pred_check
      _
    $region15: #{tpu_custom_call.1} parent=1 // pred_check_branch
      %31 = sbr.rel (0) target = $region17
    $region16: #{tpu_custom_call.1} parent=1 // pred_region
      _
    $region17: #{tpu_custom_call.1} parent=1 // pred_fallthru
      _
    // Predicated region
    $region18: #{tpu_custom_call.1} parent=1 // pred_check
      _
    $region19: #{tpu_custom_call.1} parent=1 // pred_check_branch
      %33 = sbr.rel (0) target = $region21
    $region20: #{tpu_custom_call.1} parent=1 // pred_region
      _
    $region21: #{tpu_custom_call.1} parent=1 // pred_fallthru
      _
    // Predicated region
    $region22: #{tpu_custom_call.1} parent=1 // pred_check
      _
    $region23: #{tpu_custom_call.1} parent=1 // pred_check_branch
      %35 = sbr.rel (0) target = $region25
    $region24: #{tpu_custom_call.1} parent=1 // pred_region
      _
    $region25: #{tpu_custom_call.1} parent=1 // pred_fallthru
      _
    // Predicated region
    $region26: #{tpu_custom_call.1} parent=1 // pred_check
      _
    $region27: #{tpu_custom_call.1} parent=1 // pred_check_branch
      %37 = sbr.rel (0) target = $region29
    $region28: #{tpu_custom_call.1} parent=1 // pred_region
      %39 = dma.done [#allocation3], 5120
    $region29: #{tpu_custom_call.1} parent=1 // pred_fallthru
      _
    %v40 = vlaneseq
    %v41 = vand.u32 %v40, 127
    %v42 = vld [vmem:[%s0] sm:$0xff]
    %v43 = vld [vmem:[%s0 + $0x8] sm:$0xff]
    %v44 = vld [vmem:[%s0 + $0x10] sm:$0xff]
    %v45 = vld [vmem:[%s0 + $0x18] sm:$0xff]
    %46 = vset.pattern.permute.xlu0 0
    %47 = vperm.xlu0 %46, %v42
    %v48 = vpop.permute.xlu0 %47
    %49 = vset.pattern.permute.xlu0 0
    %50 = vperm.xlu0 %49, %v43
    %v51 = vpop.permute.xlu0 %50
    %52 = vset.pattern.permute.xlu0 0
    %53 = vperm.xlu0 %52, %v44
    %v54 = vpop.permute.xlu0 %53
    %55 = vset.pattern.permute.xlu0 0
    %56 = vperm.xlu0 %55, %v45
    %v57 = vpop.permute.xlu0 %56
    %vm58 = vcmp.eq.s32.totalorder %v48, %v41
    %vm59 = vcmp.eq.s32.totalorder %v51, %v41
    %vm60 = vcmp.eq.s32.totalorder %v54, %v41
    %vm61 = vcmp.eq.s32.totalorder %v57, %v41
    %v62 = vsel %vm58, 1, 0
    %v63 = vsel %vm59, 1, 0
    %v64 = vsel %vm60, 1, 0
    %v65 = vsel %vm61, 1, 0
    %v66 = vcvt.s32.f32 %v62
    %v67 = vcvt.s32.f32 %v63
    %v68 = vcvt.s32.f32 %v64
    %v69 = vcvt.s32.f32 %v65
    %v70 = vpack.c.bf16 %v67, %v66
    %v71 = vpack.c.bf16 %v69, %v68
    %v72 = vld [vmem:[#allocation2] sm:$0xf]
    %v73 = vld [vmem:[#allocation2 + $0x4] sm:$0xf]
    %v74 = vld [vmem:[#allocation2 + $0x8] sm:$0xf]
    %v75 = vld [vmem:[#allocation2 + $0xc] sm:$0xf]
    %v76 = vld [vmem:[#allocation2 + $0x10] sm:$0xf]
    %v77 = vld [vmem:[#allocation2 + $0x14] sm:$0xf]
    %v78 = vld [vmem:[#allocation2 + $0x18] sm:$0xf]
    %v79 = vld [vmem:[#allocation2 + $0x1c] sm:$0xf]
    %v80 = vld [vmem:[#allocation2 + $0x20] sm:$0xf]
    %v81 = vld [vmem:[#allocation2 + $0x24] sm:$0xf]
    %v82 = vld [vmem:[#allocation2 + $0x28] sm:$0xf]
    %v83 = vld [vmem:[#allocation2 + $0x2c] sm:$0xf]
    %v84 = vld [vmem:[#allocation2 + $0x30] sm:$0xf]
    %v85 = vld [vmem:[#allocation2 + $0x34] sm:$0xf]
    %v86 = vld [vmem:[#allocation2 + $0x38] sm:$0xf]
    %v87 = vld [vmem:[#allocation2 + $0x3c] sm:$0xf]
    %s88 = scalar_lea.vmem %s0, 32
    %v89 = vld [vmem:[%s88] sm:$0xff]
    %v90 = vld [vmem:[%s88 + $0x8] sm:$0xff]
    %v91 = vld [vmem:[%s88 + $0x10] sm:$0xff]
    %v92 = vld [vmem:[%s88 + $0x18] sm:$0xff]
    %93 = vset.pattern.permute.xlu0 0
    %94 = vperm.xlu0 %93, %v89
    %v95 = vpop.permute.xlu0 %94
    %96 = vset.pattern.permute.xlu0 0
    %97 = vperm.xlu0 %96, %v90
    %v98 = vpop.permute.xlu0 %97
    %99 = vset.pattern.permute.xlu0 0
    %100 = vperm.xlu0 %99, %v91
    %v101 = vpop.permute.xlu0 %100
    %102 = vset.pattern.permute.xlu0 0
    %103 = vperm.xlu0 %102, %v92
    %v104 = vpop.permute.xlu0 %103
    %vm105 = vcmp.eq.s32.totalorder %v95, %v41
    %vm106 = vcmp.eq.s32.totalorder %v98, %v41
    %vm107 = vcmp.eq.s32.totalorder %v101, %v41
    %vm108 = vcmp.eq.s32.totalorder %v104, %v41
    %v109 = vsel %vm105, 1, 0
    %v110 = vsel %vm106, 1, 0
    %v111 = vsel %vm107, 1, 0
    %v112 = vsel %vm108, 1, 0
    %v113 = vcvt.s32.f32 %v109
    %v114 = vcvt.s32.f32 %v110
    %v115 = vcvt.s32.f32 %v111
    %v116 = vcvt.s32.f32 %v112
    %v117 = vpack.c.bf16 %v114, %v113
    %v118 = vpack.c.bf16 %v116, %v115
    %s119 = scalar_lea.vmem [#allocation2], 64
    %v120 = vld [vmem:[%s119] sm:$0xf]
    %v121 = vld [vmem:[%s119 + $0x4] sm:$0xf]
    %v122 = vld [vmem:[%s119 + $0x8] sm:$0xf]
    %v123 = vld [vmem:[%s119 + $0xc] sm:$0xf]
    %v124 = vld [vmem:[%s119 + $0x10] sm:$0xf]
    %v125 = vld [vmem:[%s119 + $0x14] sm:$0xf]
    %v126 = vld [vmem:[%s119 + $0x18] sm:$0xf]
    %v127 = vld [vmem:[%s119 + $0x1c] sm:$0xf]
    %v128 = vld [vmem:[%s119 + $0x20] sm:$0xf]
    %v129 = vld [vmem:[%s119 + $0x24] sm:$0xf]
    %v130 = vld [vmem:[%s119 + $0x28] sm:$0xf]
    %v131 = vld [vmem:[%s119 + $0x2c] sm:$0xf]
    %v132 = vld [vmem:[%s119 + $0x30] sm:$0xf]
    %v133 = vld [vmem:[%s119 + $0x34] sm:$0xf]
    %v134 = vld [vmem:[%s119 + $0x38] sm:$0xf]
    %v135 = vld [vmem:[%s119 + $0x3c] sm:$0xf]
    %v152 = vunpack.c.l.b16 %v120
    %v153 = vunpack.c.l.b16 %v121
    %v154 = vunpack.c.l.b16 %v122
    %v155 = vunpack.c.l.b16 %v123
    %v156 = vunpack.c.l.b16 %v124
    %v157 = vunpack.c.l.b16 %v125
    %v158 = vunpack.c.l.b16 %v126
    %v159 = vunpack.c.l.b16 %v127
    %v160 = vunpack.c.l.b16 %v128
    %v161 = vunpack.c.l.b16 %v129
    %v162 = vunpack.c.l.b16 %v130
    %v163 = vunpack.c.l.b16 %v131
    %v164 = vunpack.c.l.b16 %v132
    %v165 = vunpack.c.l.b16 %v133
    %v166 = vunpack.c.l.b16 %v134
    %v167 = vunpack.c.l.b16 %v135
    %v168 = vpack.c.b16 %v153, %v152
    %v169 = vpack.c.b16 %v155, %v154
    %v170 = vpack.c.b16 %v157, %v156
    %v171 = vpack.c.b16 %v159, %v158
    %v172 = vpack.c.b16 %v161, %v160
    %v173 = vpack.c.b16 %v163, %v162
    %v174 = vpack.c.b16 %v165, %v164
    %v175 = vpack.c.b16 %v167, %v166
    %184 = vmatpush.bf16.msra.mxu0 %v175
    %185 = vmatpush.bf16.msra.mxu0 %v174
    %186 = vmatpush.bf16.msra.mxu0 %v173
    %187 = vmatpush.bf16.msra.mxu0 %v172
    %188 = vmatpush.bf16.msra.mxu0 %v171
    %189 = vmatpush.bf16.msra.mxu0 %v170
    %190 = vmatpush.bf16.msra.mxu0 %v169
    %191 = vmatpush.bf16.msra.mxu0 %v168
    %192 = vmatmul.bf16.gmra.mxu0 %v117
    %v193 = vpop.f32.mrf.mxu0
    %v194 = vadd.f32 0.0, %v193
    %v195 = vpop.f32.mrf.mxu0
    %v196 = vadd.f32 0.0, %v195
    %197 = vmatmul.bf16.gmra.mxu0 %v118
    %v198 = vpop.f32.mrf.mxu0
    %v199 = vadd.f32 0.0, %v198
    %v200 = vpop.f32.mrf.mxu0
    %v201 = vadd.f32 0.0, %v200
    %202 = vdwg.mxu0
    %v219 = vunpack.c.l.b16 %v72
    %v220 = vunpack.c.l.b16 %v73
    %v221 = vunpack.c.l.b16 %v74
    %v222 = vunpack.c.l.b16 %v75
    %v223 = vunpack.c.l.b16 %v76
    %v224 = vunpack.c.l.b16 %v77
    %v225 = vunpack.c.l.b16 %v78
    %v226 = vunpack.c.l.b16 %v79
    %v227 = vunpack.c.l.b16 %v80
    %v228 = vunpack.c.l.b16 %v81
    %v229 = vunpack.c.l.b16 %v82
    %v230 = vunpack.c.l.b16 %v83
    %v231 = vunpack.c.l.b16 %v84
    %v232 = vunpack.c.l.b16 %v85
    %v233 = vunpack.c.l.b16 %v86
    %v234 = vunpack.c.l.b16 %v87
    %v235 = vpack.c.b16 %v220, %v219
    %v236 = vpack.c.b16 %v222, %v221
    %v237 = vpack.c.b16 %v224, %v223
    %v238 = vpack.c.b16 %v226, %v225
    %v239 = vpack.c.b16 %v228, %v227
    %v240 = vpack.c.b16 %v230, %v229
    %v241 = vpack.c.b16 %v232, %v231
    %v242 = vpack.c.b16 %v234, %v233
    %251 = vmatpush.bf16.msra.mxu0 %v242
    %252 = vmatpush.bf16.msra.mxu0 %v241
    %253 = vmatpush.bf16.msra.mxu0 %v240
    %254 = vmatpush.bf16.msra.mxu0 %v239
    %255 = vmatpush.bf16.msra.mxu0 %v238
    %256 = vmatpush.bf16.msra.mxu0 %v237
    %257 = vmatpush.bf16.msra.mxu0 %v236
    %258 = vmatpush.bf16.msra.mxu0 %v235
    %259 = vmatmul.bf16.gmra.mxu0 %v70
    %v260 = vpop.f32.mrf.mxu0
    %v261 = vadd.f32 %v194, %v260
    %v262 = vpop.f32.mrf.mxu0
    %v263 = vadd.f32 %v196, %v262
    %264 = vmatmul.bf16.gmra.mxu0 %v71
    %v265 = vpop.f32.mrf.mxu0
    %v266 = vadd.f32 %v199, %v265
    %v267 = vpop.f32.mrf.mxu0
    %v268 = vadd.f32 %v201, %v267
    %269 = vdwg.mxu0
    %s270 = scalar_lea.vmem %s0, 64
    %v271 = vld [vmem:[%s270] sm:$0xff]
    %v272 = vld [vmem:[%s270 + $0x8] sm:$0xff]
    %v273 = vld [vmem:[%s270 + $0x10] sm:$0xff]
    %v274 = vld [vmem:[%s270 + $0x18] sm:$0xff]
    %275 = vset.pattern.permute.xlu0 0
    %276 = vperm.xlu0 %275, %v271
    %v277 = vpop.permute.xlu0 %276
    %278 = vset.pattern.permute.xlu0 0
    %279 = vperm.xlu0 %278, %v272
    %v280 = vpop.permute.xlu0 %279
    %281 = vset.pattern.permute.xlu0 0
    %282 = vperm.xlu0 %281, %v273
    %v283 = vpop.permute.xlu0 %282
    %284 = vset.pattern.permute.xlu0 0
    %285 = vperm.xlu0 %284, %v274
    %v286 = vpop.permute.xlu0 %285
    %vm287 = vcmp.eq.s32.totalorder %v277, %v41
    %vm288 = vcmp.eq.s32.totalorder %v280, %v41
    %vm289 = vcmp.eq.s32.totalorder %v283, %v41
    %vm290 = vcmp.eq.s32.totalorder %v286, %v41
    %v291 = vsel %vm287, 1, 0
    %v292 = vsel %vm288, 1, 0
    %v293 = vsel %vm289, 1, 0
    %v294 = vsel %vm290, 1, 0
    %v295 = vcvt.s32.f32 %v291
    %v296 = vcvt.s32.f32 %v292
    %v297 = vcvt.s32.f32 %v293
    %v298 = vcvt.s32.f32 %v294
    %v299 = vpack.c.bf16 %v296, %v295
    %v300 = vpack.c.bf16 %v298, %v297
    %s301 = scalar_lea.vmem [#allocation2], 128
    %v302 = vld [vmem:[%s301] sm:$0xf]
    %v303 = vld [vmem:[%s301 + $0x4] sm:$0xf]
    %v304 = vld [vmem:[%s301 + $0x8] sm:$0xf]
    %v305 = vld [vmem:[%s301 + $0xc] sm:$0xf]
    %v306 = vld [vmem:[%s301 + $0x10] sm:$0xf]
    %v307 = vld [vmem:[%s301 + $0x14] sm:$0xf]
    %v308 = vld [vmem:[%s301 + $0x18] sm:$0xf]
    %v309 = vld [vmem:[%s301 + $0x1c] sm:$0xf]
    %v310 = vld [vmem:[%s301 + $0x20] sm:$0xf]
    %v311 = vld [vmem:[%s301 + $0x24] sm:$0xf]
    %v312 = vld [vmem:[%s301 + $0x28] sm:$0xf]
    %v313 = vld [vmem:[%s301 + $0x2c] sm:$0xf]
    %v314 = vld [vmem:[%s301 + $0x30] sm:$0xf]
    %v315 = vld [vmem:[%s301 + $0x34] sm:$0xf]
    %v316 = vld [vmem:[%s301 + $0x38] sm:$0xf]
    %v317 = vld [vmem:[%s301 + $0x3c] sm:$0xf]
    %v334 = vunpack.c.l.b16 %v302
    %v335 = vunpack.c.l.b16 %v303
    %v336 = vunpack.c.l.b16 %v304
    %v337 = vunpack.c.l.b16 %v305
    %v338 = vunpack.c.l.b16 %v306
    %v339 = vunpack.c.l.b16 %v307
    %v340 = vunpack.c.l.b16 %v308
    %v341 = vunpack.c.l.b16 %v309
    %v342 = vunpack.c.l.b16 %v310
    %v343 = vunpack.c.l.b16 %v311
    %v344 = vunpack.c.l.b16 %v312
    %v345 = vunpack.c.l.b16 %v313
    %v346 = vunpack.c.l.b16 %v314
    %v347 = vunpack.c.l.b16 %v315
    %v348 = vunpack.c.l.b16 %v316
    %v349 = vunpack.c.l.b16 %v317
    %v350 = vpack.c.b16 %v335, %v334
    %v351 = vpack.c.b16 %v337, %v336
    %v352 = vpack.c.b16 %v339, %v338
    %v353 = vpack.c.b16 %v341, %v340
    %v354 = vpack.c.b16 %v343, %v342
    %v355 = vpack.c.b16 %v345, %v344
    %v356 = vpack.c.b16 %v347, %v346
    %v357 = vpack.c.b16 %v349, %v348
    %366 = vmatpush.bf16.msra.mxu0 %v357
    %367 = vmatpush.bf16.msra.mxu0 %v356
    %368 = vmatpush.bf16.msra.mxu0 %v355
    %369 = vmatpush.bf16.msra.mxu0 %v354
    %370 = vmatpush.bf16.msra.mxu0 %v353
    %371 = vmatpush.bf16.msra.mxu0 %v352
    %372 = vmatpush.bf16.msra.mxu0 %v351
    %373 = vmatpush.bf16.msra.mxu0 %v350
    %374 = vmatmul.bf16.gmra.mxu0 %v299
    %v375 = vpop.f32.mrf.mxu0
    %v376 = vadd.f32 0.0, %v375
    %v377 = vpop.f32.mrf.mxu0
    %v378 = vadd.f32 0.0, %v377
    %379 = vmatmul.bf16.gmra.mxu0 %v300
    %v380 = vpop.f32.mrf.mxu0
    %v381 = vadd.f32 0.0, %v380
    %v382 = vpop.f32.mrf.mxu0
    %v383 = vadd.f32 0.0, %v382
    %384 = vdwg.mxu0
    %v385 = vadd.f32 %v261, %v376
    %v386 = vadd.f32 %v263, %v378
    %v387 = vadd.f32 %v266, %v381
    %v388 = vadd.f32 %v268, %v383
    %s389 = scalar_lea.vmem %s0, 96
    %v390 = vld [vmem:[%s389] sm:$0xff]
    %v391 = vld [vmem:[%s389 + $0x8] sm:$0xff]
    %v392 = vld [vmem:[%s389 + $0x10] sm:$0xff]
    %v393 = vld [vmem:[%s389 + $0x18] sm:$0xff]
    %394 = vset.pattern.permute.xlu0 0
    %395 = vperm.xlu0 %394, %v390
    %v396 = vpop.permute.xlu0 %395
    %397 = vset.pattern.permute.xlu0 0
    %398 = vperm.xlu0 %397, %v391
    %v399 = vpop.permute.xlu0 %398
    %400 = vset.pattern.permute.xlu0 0
    %401 = vperm.xlu0 %400, %v392
    %v402 = vpop.permute.xlu0 %401
    %403 = vset.pattern.permute.xlu0 0
    %404 = vperm.xlu0 %403, %v393
    %v405 = vpop.permute.xlu0 %404
    %vm406 = vcmp.eq.s32.totalorder %v396, %v41
    %vm407 = vcmp.eq.s32.totalorder %v399, %v41
    %vm408 = vcmp.eq.s32.totalorder %v402, %v41
    %vm409 = vcmp.eq.s32.totalorder %v405, %v41
    %v410 = vsel %vm406, 1, 0
    %v411 = vsel %vm407, 1, 0
    %v412 = vsel %vm408, 1, 0
    %v413 = vsel %vm409, 1, 0
    %v414 = vcvt.s32.f32 %v410
    %v415 = vcvt.s32.f32 %v411
    %v416 = vcvt.s32.f32 %v412
    %v417 = vcvt.s32.f32 %v413
    %v418 = vpack.c.bf16 %v415, %v414
    %v419 = vpack.c.bf16 %v417, %v416
    %s420 = scalar_lea.vmem [#allocation2], 192
    %v421 = vld [vmem:[%s420] sm:$0xf]
    %v422 = vld [vmem:[%s420 + $0x4] sm:$0xf]
    %v423 = vld [vmem:[%s420 + $0x8] sm:$0xf]
    %v424 = vld [vmem:[%s420 + $0xc] sm:$0xf]
    %v425 = vld [vmem:[%s420 + $0x10] sm:$0xf]
    %v426 = vld [vmem:[%s420 + $0x14] sm:$0xf]
    %v427 = vld [vmem:[%s420 + $0x18] sm:$0xf]
    %v428 = vld [vmem:[%s420 + $0x1c] sm:$0xf]
    %v429 = vld [vmem:[%s420 + $0x20] sm:$0xf]
    %v430 = vld [vmem:[%s420 + $0x24] sm:$0xf]
    %v431 = vld [vmem:[%s420 + $0x28] sm:$0xf]
    %v432 = vld [vmem:[%s420 + $0x2c] sm:$0xf]
    %v433 = vld [vmem:[%s420 + $0x30] sm:$0xf]
    %v434 = vld [vmem:[%s420 + $0x34] sm:$0xf]
    %v435 = vld [vmem:[%s420 + $0x38] sm:$0xf]
    %v436 = vld [vmem:[%s420 + $0x3c] sm:$0xf]
    %v453 = vunpack.c.l.b16 %v421
    %v454 = vunpack.c.l.b16 %v422
    %v455 = vunpack.c.l.b16 %v423
    %v456 = vunpack.c.l.b16 %v424
    %v457 = vunpack.c.l.b16 %v425
    %v458 = vunpack.c.l.b16 %v426
    %v459 = vunpack.c.l.b16 %v427
    %v460 = vunpack.c.l.b16 %v428
    %v461 = vunpack.c.l.b16 %v429
    %v462 = vunpack.c.l.b16 %v430
    %v463 = vunpack.c.l.b16 %v431
    %v464 = vunpack.c.l.b16 %v432
    %v465 = vunpack.c.l.b16 %v433
    %v466 = vunpack.c.l.b16 %v434
    %v467 = vunpack.c.l.b16 %v435
    %v468 = vunpack.c.l.b16 %v436
    %v469 = vpack.c.b16 %v454, %v453
    %v470 = vpack.c.b16 %v456, %v455
    %v471 = vpack.c.b16 %v458, %v457
    %v472 = vpack.c.b16 %v460, %v459
    %v473 = vpack.c.b16 %v462, %v461
    %v474 = vpack.c.b16 %v464, %v463
    %v475 = vpack.c.b16 %v466, %v465
    %v476 = vpack.c.b16 %v468, %v467
    %485 = vmatpush.bf16.msra.mxu0 %v476
    %486 = vmatpush.bf16.msra.mxu0 %v475
    %487 = vmatpush.bf16.msra.mxu0 %v474
    %488 = vmatpush.bf16.msra.mxu0 %v473
    %489 = vmatpush.bf16.msra.mxu0 %v472
    %490 = vmatpush.bf16.msra.mxu0 %v471
    %491 = vmatpush.bf16.msra.mxu0 %v470
    %492 = vmatpush.bf16.msra.mxu0 %v469
    %493 = vmatmul.bf16.gmra.mxu0 %v418
    %v494 = vpop.f32.mrf.mxu0
    %v495 = vadd.f32 0.0, %v494
    %v496 = vpop.f32.mrf.mxu0
    %v497 = vadd.f32 0.0, %v496
    %498 = vmatmul.bf16.gmra.mxu0 %v419
    %v499 = vpop.f32.mrf.mxu0
    %v500 = vadd.f32 0.0, %v499
    %v501 = vpop.f32.mrf.mxu0
    %v502 = vadd.f32 0.0, %v501
    %503 = vdwg.mxu0
    %v504 = vadd.f32 %v385, %v495
    %v505 = vadd.f32 %v386, %v497
    %v506 = vadd.f32 %v387, %v500
    %v507 = vadd.f32 %v388, %v502
    %s508 = scalar_lea.vmem %s0, 128
    %v509 = vld [vmem:[%s508] sm:$0xff]
    %v510 = vld [vmem:[%s508 + $0x8] sm:$0xff]
    %v511 = vld [vmem:[%s508 + $0x10] sm:$0xff]
    %v512 = vld [vmem:[%s508 + $0x18] sm:$0xff]
    %513 = vset.pattern.permute.xlu0 0
    %514 = vperm.xlu0 %513, %v509
    %v515 = vpop.permute.xlu0 %514
    %516 = vset.pattern.permute.xlu0 0
    %517 = vperm.xlu0 %516, %v510
    %v518 = vpop.permute.xlu0 %517
    %519 = vset.pattern.permute.xlu0 0
    %520 = vperm.xlu0 %519, %v511
    %v521 = vpop.permute.xlu0 %520
    %522 = vset.pattern.permute.xlu0 0
    %523 = vperm.xlu0 %522, %v512
    %v524 = vpop.permute.xlu0 %523
    %vm525 = vcmp.eq.s32.totalorder %v515, %v41
    %vm526 = vcmp.eq.s32.totalorder %v518, %v41
    %vm527 = vcmp.eq.s32.totalorder %v521, %v41
    %vm528 = vcmp.eq.s32.totalorder %v524, %v41
    %v529 = vsel %vm525, 1, 0
    %v530 = vsel %vm526, 1, 0
    %v531 = vsel %vm527, 1, 0
    %v532 = vsel %vm528, 1, 0
    %v533 = vcvt.s32.f32 %v529
    %v534 = vcvt.s32.f32 %v530
    %v535 = vcvt.s32.f32 %v531
    %v536 = vcvt.s32.f32 %v532
    %v537 = vpack.c.bf16 %v534, %v533
    %v538 = vpack.c.bf16 %v536, %v535
    %s539 = scalar_lea.vmem [#allocation2], 256
    %v540 = vld [vmem:[%s539] sm:$0xf]
    %v541 = vld [vmem:[%s539 + $0x4] sm:$0xf]
    %v542 = vld [vmem:[%s539 + $0x8] sm:$0xf]
    %v543 = vld [vmem:[%s539 + $0xc] sm:$0xf]
    %v544 = vld [vmem:[%s539 + $0x10] sm:$0xf]
    %v545 = vld [vmem:[%s539 + $0x14] sm:$0xf]
    %v546 = vld [vmem:[%s539 + $0x18] sm:$0xf]
    %v547 = vld [vmem:[%s539 + $0x1c] sm:$0xf]
    %v548 = vld [vmem:[%s539 + $0x20] sm:$0xf]
    %v549 = vld [vmem:[%s539 + $0x24] sm:$0xf]
    %v550 = vld [vmem:[%s539 + $0x28] sm:$0xf]
    %v551 = vld [vmem:[%s539 + $0x2c] sm:$0xf]
    %v552 = vld [vmem:[%s539 + $0x30] sm:$0xf]
    %v553 = vld [vmem:[%s539 + $0x34] sm:$0xf]
    %v554 = vld [vmem:[%s539 + $0x38] sm:$0xf]
    %v555 = vld [vmem:[%s539 + $0x3c] sm:$0xf]
    %v572 = vunpack.c.l.b16 %v540
    %v573 = vunpack.c.l.b16 %v541
    %v574 = vunpack.c.l.b16 %v542
    %v575 = vunpack.c.l.b16 %v543
    %v576 = vunpack.c.l.b16 %v544
    %v577 = vunpack.c.l.b16 %v545
    %v578 = vunpack.c.l.b16 %v546
    %v579 = vunpack.c.l.b16 %v547
    %v580 = vunpack.c.l.b16 %v548
    %v581 = vunpack.c.l.b16 %v549
    %v582 = vunpack.c.l.b16 %v550
    %v583 = vunpack.c.l.b16 %v551
    %v584 = vunpack.c.l.b16 %v552
    %v585 = vunpack.c.l.b16 %v553
    %v586 = vunpack.c.l.b16 %v554
    %v587 = vunpack.c.l.b16 %v555
    %v588 = vpack.c.b16 %v573, %v572
    %v589 = vpack.c.b16 %v575, %v574
    %v590 = vpack.c.b16 %v577, %v576
    %v591 = vpack.c.b16 %v579, %v578
    %v592 = vpack.c.b16 %v581, %v580
    %v593 = vpack.c.b16 %v583, %v582
    %v594 = vpack.c.b16 %v585, %v584
    %v595 = vpack.c.b16 %v587, %v586
    %604 = vmatpush.bf16.msra.mxu0 %v595
    %605 = vmatpush.bf16.msra.mxu0 %v594
    %606 = vmatpush.bf16.msra.mxu0 %v593
    %607 = vmatpush.bf16.msra.mxu0 %v592
    %608 = vmatpush.bf16.msra.mxu0 %v591
    %609 = vmatpush.bf16.msra.mxu0 %v590
    %610 = vmatpush.bf16.msra.mxu0 %v589
    %611 = vmatpush.bf16.msra.mxu0 %v588
    %612 = vmatmul.bf16.gmra.mxu0 %v537
    %v613 = vpop.f32.mrf.mxu0
    %v614 = vadd.f32 0.0, %v613
    %v615 = vpop.f32.mrf.mxu0
    %v616 = vadd.f32 0.0, %v615
    %617 = vmatmul.bf16.gmra.mxu0 %v538
    %v618 = vpop.f32.mrf.mxu0
    %v619 = vadd.f32 0.0, %v618
    %v620 = vpop.f32.mrf.mxu0
    %v621 = vadd.f32 0.0, %v620
    %622 = vdwg.mxu0
    %v623 = vadd.f32 %v504, %v614
    %v624 = vadd.f32 %v505, %v616
    %v625 = vadd.f32 %v506, %v619
    %v626 = vadd.f32 %v507, %v621
    %v627 = vld [vmem:[%s2] sm:$0x1]
    %v629 = vperm.slane %v627, 0
    %v631 = vadd.f32 %v623, %v629
    %v632 = vadd.f32 %v624, %v629
    %v633 = vadd.f32 %v625, %v629
    %v634 = vadd.f32 %v626, %v629
    %v635 = vmax.f32 %v631, 0.0
    %v636 = vmax.f32 %v632, 0.0
    %v637 = vmax.f32 %v633, 0.0
    %v638 = vmax.f32 %v634, 0.0
    %v639 = vlaneseq
    %v640 = vshrl.u32 %v639, 7
    %v641 = vadd.s32 %v640, 8
    %v642 = vld [vmem:[%s3] sm:$0x1]
    %v643 = vperm.slane %v642, 0
    %vm644 = vcmp.lt.s32.totalorder %v640, %v643
    %vm645 = vcmp.lt.s32.totalorder %v641, %v643
    %v646 = vsel %vm644, 1, 0
    %v647 = vsel %vm645, 1, 0
    %vm648 = vcmp.eq.s32.totalorder %v646, 1
    %vm649 = vcmp.eq.s32.totalorder %v647, 1
    %v650 = vsel %vm648, %v635, 0.0
    %v651 = vsel %vm649, %v636, 0.0
    %v652 = vsel %vm648, %v637, 0.0
    %v653 = vsel %vm649, %v638, 0.0
    %v654 = vmax.f32 %v650, %v651
    %v655 = vrot.slane %v654, 4
    %v656 = vmax.f32 %v654, %v655
    %v657 = vrot.slane %v656, 2
    %v658 = vmax.f32 %v656, %v657
    %v659 = vrot.slane %v658, 1
    %v660 = vmax.f32 %v658, %v659
    %v661 = vmax.f32 %v652, %v653
    %v662 = vrot.slane %v661, 4
    %v663 = vmax.f32 %v661, %v662
    %v664 = vrot.slane %v663, 2
    %v665 = vmax.f32 %v663, %v664
    %v666 = vrot.slane %v665, 1
    %v667 = vmax.f32 %v665, %v666
    %vm670 = vcmask 1041409
    %v671 = vsel %vm670, %v667, %v660
    %vm673 = vcmask 1041408
    %v674 = vsel %vm673, %v671, 0.0
    %v675 = vpack.c.bf16 %v674, %v674
    %v676 = vld [vmem:[%s4] sm:$0xf]
    %v677 = vld [vmem:[%s4 + $0x4] sm:$0xf]
    %v678 = vld [vmem:[%s4 + $0x8] sm:$0xf]
    %v679 = vld [vmem:[%s4 + $0xc] sm:$0xf]
    %v680 = vld [vmem:[%s4 + $0x10] sm:$0xf]
    %v681 = vld [vmem:[%s4 + $0x14] sm:$0xf]
    %v682 = vld [vmem:[%s4 + $0x18] sm:$0xf]
    %v683 = vld [vmem:[%s4 + $0x1c] sm:$0xf]
    %v684 = vld [vmem:[%s4 + $0x20] sm:$0xf]
    %v685 = vld [vmem:[%s4 + $0x24] sm:$0xf]
    %v686 = vld [vmem:[%s4 + $0x28] sm:$0xf]
    %v687 = vld [vmem:[%s4 + $0x2c] sm:$0xf]
    %v688 = vld [vmem:[%s4 + $0x30] sm:$0xf]
    %v689 = vld [vmem:[%s4 + $0x34] sm:$0xf]
    %v690 = vld [vmem:[%s4 + $0x38] sm:$0xf]
    %v691 = vld [vmem:[%s4 + $0x3c] sm:$0xf]
    %v692 = vld [vmem:[%s5] sm:$0x1]
    %v694 = vperm.slane %v692, 0
    %v712 = vunpack.c.l.b16 %v676
    %v713 = vunpack.c.l.b16 %v677
    %v714 = vunpack.c.l.b16 %v678
    %v715 = vunpack.c.l.b16 %v679
    %v716 = vunpack.c.l.b16 %v680
    %v717 = vunpack.c.l.b16 %v681
    %v718 = vunpack.c.l.b16 %v682
    %v719 = vunpack.c.l.b16 %v683
    %v720 = vunpack.c.l.b16 %v684
    %v721 = vunpack.c.l.b16 %v685
    %v722 = vunpack.c.l.b16 %v686
    %v723 = vunpack.c.l.b16 %v687
    %v724 = vunpack.c.l.b16 %v688
    %v725 = vunpack.c.l.b16 %v689
    %v726 = vunpack.c.l.b16 %v690
    %v727 = vunpack.c.l.b16 %v691
    %v728 = vpack.c.b16 %v713, %v712
    %v729 = vpack.c.b16 %v715, %v714
    %v730 = vpack.c.b16 %v717, %v716
    %v731 = vpack.c.b16 %v719, %v718
    %v732 = vpack.c.b16 %v721, %v720
    %v733 = vpack.c.b16 %v723, %v722
    %v734 = vpack.c.b16 %v725, %v724
    %v735 = vpack.c.b16 %v727, %v726
    %744 = vmatpush.bf16.msra.mxu0 %v735
    %745 = vmatpush.bf16.msra.mxu0 %v734
    %746 = vmatpush.bf16.msra.mxu0 %v733
    %747 = vmatpush.bf16.msra.mxu0 %v732
    %748 = vmatpush.bf16.msra.mxu0 %v731
    %749 = vmatpush.bf16.msra.mxu0 %v730
    %750 = vmatpush.bf16.msra.mxu0 %v729
    %751 = vmatpush.bf16.msra.mxu0 %v728
    %752 = vmatmul.bf16.gmra.mxu0 %v675
    %v753 = vpop.f32.mrf.mxu0
    %v754 = vadd.f32 %v694, %v753
    %v755 = vpop.f32.mrf.mxu0
    %756 = vdwg.mxu0
    %757 = vst [vmem:[#allocation5] sm:$0xff] %v754
    // Predicated region
    $region30: #{tpu_custom_call.1} parent=1 // pred_check
      _
    $region31: #{tpu_custom_call.1} parent=1 // pred_check_branch
      %759 = sbr.rel (0) target = $region33
    $region32: #{tpu_custom_call.1} parent=1 // pred_region
      %761 = vsyncadd [#allocation4], 0
      %s763 = sshll.u32 [#allocation5], 4
      %s764 = int_to_ptr.vmem [resolvable:$true] %s763
      %s765 = sshll.u32 %s6, 4
      %s766 = int_to_ptr.hbm [resolvable:$true] %s765
      %768 = dma.vmem_to_hbm [thread:$0]  %s764, 128, %s766, [#allocation4]
    $region33: #{tpu_custom_call.1} parent=1 // pred_fallthru
      _
    // Predicated region
    $region34: #{tpu_custom_call.1} parent=1 // pred_check
      _
    $region35: #{tpu_custom_call.1} parent=1 // pred_check_branch
      %770 = sbr.rel (0) target = $region37
    $region36: #{tpu_custom_call.1} parent=1 // pred_region
      %772 = dma.done [#allocation4], 128
    $region37: #{tpu_custom_call.1} parent=1 // pred_fallthru
      _
    %773 = vsyncpa [#allocation3], 1
    %774 = vsyncpa [#allocation4], 1

</llo_original>
